<compile_context>
chip_gen: v7x
topology: tpu7x:2x2x1
jax: 0.10.0
libtpu: 0.0.40
codegen_flags: <defaults>
</compile_context>

<pallas_src>
import jax
import jax.numpy as jnp
from jax import lax
from jax.experimental import pallas as pl
from jax.experimental.pallas import tpu as pltpu

_TRANS_B = (((1,), (1,)), ((), ()))   # contract last dim of lhs with last dim of rhs


def soft_attention(x, w1, b1, w2, *, block_b=8):
    """Batched SoftAttention forward.

    x  : (B, K, H, W) float32
    w1 : (A, K*H*W)   lin1 weight (PyTorch layout, NOT transposed)
    b1 : (A,)         lin1 bias
    w2 : (K, A)       lin2 weight (no bias)
    Returns (z, y): z (B, H, W) float32, y (B, K) float32.
    """
    B, K, H, W = x.shape
    HW = H * W
    D = K * HW
    A = w1.shape[0]
    assert w1.shape == (A, D) and b1.shape == (A,) and w2.shape == (K, A)

    TB = min(block_b, B)
    assert B % TB == 0 and (TB % 8 == 0 or TB == B), (B, TB)

    # Wrapper-side layout glue: free contiguous reshapes / one dtype cast only
    # (no transposes -> weights stay lane-dense, no extra HBM round trips).
    x_flat = x.reshape(B, D).astype(jnp.float32)         # (B, D)
    w1_bf  = w1.astype(jnp.bfloat16)                     # (A, D)  dominant DMA, halved
    b1_row = b1.reshape(1, A).astype(jnp.float32)        # (1, A)
    w2_f   = w2.astype(jnp.float32)                      # (K, A)

    def kernel(x_ref, w1_ref, b1_ref, w2_ref, z_ref, y_ref):
        xv = x_ref[...]                                  # (TB, D) f32

        # lin1 + ReLU: (TB, D) x (A, D)^T on the MXU, bf16 in / f32 accumulate.
        h = lax.dot_general(xv.astype(jnp.bfloat16), w1_ref[...],
                            dimension_numbers=_TRANS_B,
                            preferred_element_type=jnp.float32)       # (TB, A)
        h = jnp.maximum(h + b1_ref[...], 0.0)

        # lin2 (no bias) + ReLU: (TB, A) x (K, A)^T, f32.
        logits = lax.dot_general(h, w2_ref[...],
                                 dimension_numbers=_TRANS_B,
                                 preferred_element_type=jnp.float32)  # (TB, K)
        logits = jnp.maximum(logits, 0.0)

        # softmax over K (f32; exp on EUP, approx reciprocal on the EUP slot).
        m = jnp.max(logits, axis=-1, keepdims=True)
        e = jnp.exp(logits - m)
        inv = pl.reciprocal(jnp.sum(e, axis=-1, keepdims=True), approx=True)
        y = e * inv                                      # (TB, K)
        y_ref[...] = y

        # z[b, :] = sum_k y[b, k] * x[b, k*HW:(k+1)*HW]
        # VPU broadcast-MACs on static lane slices of the flat row; avoids a
        # second (K, HW) view of x entirely.
        acc = y[:, 0:1] * xv[:, 0:HW]
        for k in range(1, K):
            acc = acc + y[:, k:k + 1] * xv[:, k * HW:(k + 1) * HW]
        z_ref[...] = acc

    z_flat, y_out = pl.pallas_call(
        kernel,
        out_shape=(jax.ShapeDtypeStruct((B, HW), jnp.float32),
                   jax.ShapeDtypeStruct((B, K), jnp.float32)),
        grid=(B // TB,),
        in_specs=[
            pl.BlockSpec((TB, D), lambda i: (i, 0)),     # x rows: streamed per step
            pl.BlockSpec((A, D), lambda i: (0, 0)),      # w1: resident across steps
            pl.BlockSpec((1, A), lambda i: (0, 0)),      # b1
            pl.BlockSpec((K, A), lambda i: (0, 0)),      # w2
        ],
        out_specs=(pl.BlockSpec((TB, HW), lambda i: (i, 0)),
                   pl.BlockSpec((TB, K), lambda i: (i, 0))),
        compiler_params=pltpu.CompilerParams(
            dimension_semantics=("parallel",)),          # shard batch across v7x TCs
    )(x_flat, w1_bf, b1_row, w2_f)

    return z_flat.reshape(B, H, W), y_out


def soft_attention_single(x, w1, b1, w2):
    """Unbatched forward matching the PyTorch module: x (K, H, W) -> (z (H, W), y (K))."""
    z, y = soft_attention(x[None], w1, b1, w2, block_b=1)
    return z[0], y[0]


def _reference(x, w1, b1, w2):
    """Pure-JAX reference mirroring the PyTorch forward (vmapped over batch)."""
    def one(xi):
        xf = xi.reshape(-1)
        h = jnp.maximum(w1 @ xf + b1, 0.0)
        logits = jnp.maximum(w2 @ h, 0.0)
        y = jax.nn.softmax(logits)
        z = jnp.einsum("k,khw->hw", y, xi)
        return z, y
    return jax.vmap(one)(x)


if __name__ == "__main__":
    # Module-implied shapes: width = height = 20 (hard-coded zeros([20, 20])),
    # K clusters, attnode hidden units; small batch for the demo.
    B, K, H, W = 16, 4, 20, 20
    ATTNODE = 32
    D = K * H * W

    key = jax.random.PRNGKey(0)
    kx, k1, kb, k2 = jax.random.split(key, 4)

    x = jax.random.normal(kx, (B, K, H, W), dtype=jnp.float32)
    bound1 = 1.0 / jnp.sqrt(jnp.float32(D))
    w1 = jax.random.uniform(k1, (ATTNODE, D), jnp.float32, -bound1, bound1)
    b1 = jax.random.uniform(kb, (ATTNODE,), jnp.float32, -bound1, bound1)
    bound2 = 1.0 / jnp.sqrt(jnp.float32(ATTNODE))
    w2 = jax.random.uniform(k2, (K, ATTNODE), jnp.float32, -bound2, bound2)

    z, y = jax.jit(soft_attention)(x, w1, b1, w2)
    jax.block_until_ready((z, y))

    z_ref, y_ref = _reference(x, w1, b1, w2)
    assert z.shape == (B, H, W) and y.shape == (B, K)
    # bf16 lin1 weights + approx softmax reciprocal => looser tolerance than pure f32.
    assert jnp.allclose(y, y_ref, atol=3e-2, rtol=3e-2)
    assert jnp.allclose(z, z_ref, atol=3e-2, rtol=3e-2)

    print("KERNEL_OK")
</pallas_src>

<mosaic_0001>
module attributes {stable_mosaic.version = 11 : i64} {
  func.func @kernel(%arg0: i32, %arg1: memref<8x1600xf32, #tpu.memory_space<vmem>>, %arg2: memref<32x1600xbf16, #tpu.memory_space<vmem>>, %arg3: memref<1x32xf32, #tpu.memory_space<vmem>>, %arg4: memref<4x32xf32, #tpu.memory_space<vmem>>, %arg5: memref<8x400xf32, #tpu.memory_space<vmem>>, %arg6: memref<8x4xf32, #tpu.memory_space<vmem>>) attributes {dimension_semantics = [#tpu.dimension_semantics<parallel>], iteration_bounds = array<i64: 2>, scalar_prefetch = 0 : i64, scratch_operands = 0 : i64, tpu.core_type = #tpu.core_type<tc>, window_params = [{transform_indices = @transform_0, window_bounds = array<i64: 8, 1600>}, {pipeline_mode = #tpu.pipeline_mode<synchronous>, transform_indices = @transform_1, window_bounds = array<i64: 32, 1600>}, {pipeline_mode = #tpu.pipeline_mode<synchronous>, transform_indices = @transform_2, window_bounds = array<i64: 1, 32>}, {pipeline_mode = #tpu.pipeline_mode<synchronous>, transform_indices = @transform_3, window_bounds = array<i64: 4, 32>}, {transform_indices = @transform_4, window_bounds = array<i64: 8, 400>}, {transform_indices = @transform_5, window_bounds = array<i64: 8, 4>}]} {
    %c0 = arith.constant 0 : index
    %c0_0 = arith.constant 0 : index
    %0 = vector.load %arg1[%c0, %c0_0] : memref<8x1600xf32, #tpu.memory_space<vmem>>, vector<8x1600xf32>
    %1 = arith.truncf %0 : vector<8x1600xf32> to vector<8x1600xbf16>
    %c0_1 = arith.constant 0 : index
    %c0_2 = arith.constant 0 : index
    %2 = vector.load %arg2[%c0_1, %c0_2] : memref<32x1600xbf16, #tpu.memory_space<vmem>>, vector<32x1600xbf16>
    %cst = arith.constant dense<0.000000e+00> : vector<8x32xf32>
    %3 = tpu.matmul %1, %2, %cst {dimension_numbers = #tpu.dot_dimension_numbers<[1], [1], [0], [0], [0, 0, 1, 0], [], []>} : vector<8x1600xbf16>, vector<32x1600xbf16>, vector<8x32xf32> -> vector<8x32xf32>
    %c0_3 = arith.constant 0 : index
    %c0_4 = arith.constant 0 : index
    %4 = vector.load %arg3[%c0_3, %c0_4] : memref<1x32xf32, #tpu.memory_space<vmem>>, vector<1x32xf32>
    %5 = vector.broadcast %4 : vector<1x32xf32> to vector<8x32xf32>
    %6 = arith.addf %3, %5 : vector<8x32xf32>
    %cst_5 = arith.constant 0.000000e+00 : f32
    %7 = vector.broadcast %cst_5 : f32 to vector<8x32xf32>
    %8 = arith.maximumf %6, %7 : vector<8x32xf32>
    %c0_6 = arith.constant 0 : index
    %c0_7 = arith.constant 0 : index
    %9 = vector.load %arg4[%c0_6, %c0_7] : memref<4x32xf32, #tpu.memory_space<vmem>>, vector<4x32xf32>
    %cst_8 = arith.constant dense<0.000000e+00> : vector<8x4xf32>
    %10 = tpu.matmul %8, %9, %cst_8 {dimension_numbers = #tpu.dot_dimension_numbers<[1], [1], [0], [0], [0, 0, 1, 0], [], []>} : vector<8x32xf32>, vector<4x32xf32>, vector<8x4xf32> -> vector<8x4xf32>
    %cst_9 = arith.constant 0.000000e+00 : f32
    %11 = vector.broadcast %cst_9 : f32 to vector<8x4xf32>
    %12 = arith.maximumf %10, %11 : vector<8x4xf32>
    %cst_10 = arith.constant dense<0xFF800000> : vector<8xf32>
    %13 = vector.multi_reduction <maximumf>, %12, %cst_10 [1] : vector<8x4xf32> to vector<8xf32>
    %14 = vector.shape_cast %13 : vector<8xf32> to vector<8x1xf32>
    %15 = vector.broadcast %14 : vector<8x1xf32> to vector<8x4xf32>
    %16 = arith.subf %12, %15 : vector<8x4xf32>
    %17 = math.exp %16 : vector<8x4xf32>
    %cst_11 = arith.constant dense<0.000000e+00> : vector<8xf32>
    %18 = vector.multi_reduction <add>, %17, %cst_11 [1] : vector<8x4xf32> to vector<8xf32>
    %19 = vector.shape_cast %18 : vector<8xf32> to vector<8x1xf32>
    %20 = tpu.reciprocal %19 {approx = true} : vector<8x1xf32> -> vector<8x1xf32>
    %21 = vector.broadcast %20 : vector<8x1xf32> to vector<8x4xf32>
    %22 = arith.mulf %17, %21 : vector<8x4xf32>
    %c0_12 = arith.constant 0 : index
    %c0_13 = arith.constant 0 : index
    %23 = vector.load %arg6[%c0_12, %c0_13] : memref<8x4xf32, #tpu.memory_space<vmem>>, vector<8x4xf32>
    tpu.vector_store %arg6[%c0_12, %c0_13], %22 {strides = array<i32>} : memref<8x4xf32, #tpu.memory_space<vmem>>, vector<8x4xf32>,
    %24 = vector.extract_strided_slice %22 {offsets = [0, 0], sizes = [8, 1], strides = [1, 1]} : vector<8x4xf32> to vector<8x1xf32>
    %25 = vector.extract_strided_slice %0 {offsets = [0, 0], sizes = [8, 400], strides = [1, 1]} : vector<8x1600xf32> to vector<8x400xf32>
    %26 = vector.broadcast %24 : vector<8x1xf32> to vector<8x400xf32>
    %27 = arith.mulf %26, %25 : vector<8x400xf32>
    %28 = vector.extract_strided_slice %22 {offsets = [0, 1], sizes = [8, 1], strides = [1, 1]} : vector<8x4xf32> to vector<8x1xf32>
    %29 = vector.extract_strided_slice %0 {offsets = [0, 400], sizes = [8, 400], strides = [1, 1]} : vector<8x1600xf32> to vector<8x400xf32>
    %30 = vector.broadcast %28 : vector<8x1xf32> to vector<8x400xf32>
    %31 = arith.mulf %30, %29 : vector<8x400xf32>
    %32 = arith.addf %27, %31 : vector<8x400xf32>
    %33 = vector.extract_strided_slice %22 {offsets = [0, 2], sizes = [8, 1], strides = [1, 1]} : vector<8x4xf32> to vector<8x1xf32>
    %34 = vector.extract_strided_slice %0 {offsets = [0, 800], sizes = [8, 400], strides = [1, 1]} : vector<8x1600xf32> to vector<8x400xf32>
    %35 = vector.broadcast %33 : vector<8x1xf32> to vector<8x400xf32>
    %36 = arith.mulf %35, %34 : vector<8x400xf32>
    %37 = arith.addf %32, %36 : vector<8x400xf32>
    %38 = vector.extract_strided_slice %22 {offsets = [0, 3], sizes = [8, 1], strides = [1, 1]} : vector<8x4xf32> to vector<8x1xf32>
    %39 = vector.extract_strided_slice %0 {offsets = [0, 1200], sizes = [8, 400], strides = [1, 1]} : vector<8x1600xf32> to vector<8x400xf32>
    %40 = vector.broadcast %38 : vector<8x1xf32> to vector<8x400xf32>
    %41 = arith.mulf %40, %39 : vector<8x400xf32>
    %42 = arith.addf %37, %41 : vector<8x400xf32>
    %c0_14 = arith.constant 0 : index
    %c0_15 = arith.constant 0 : index
    %43 = vector.load %arg5[%c0_14, %c0_15] : memref<8x400xf32, #tpu.memory_space<vmem>>, vector<8x400xf32>
    tpu.vector_store %arg5[%c0_14, %c0_15], %42 {strides = array<i32>} : memref<8x400xf32, #tpu.memory_space<vmem>>, vector<8x400xf32>,
    return
  }
  func.func @transform_0(%arg0: i32) -> (i32, i32) {
    %c0_i32 = arith.constant 0 : i32
    %c0_i32_0 = arith.constant 0 : i32
    return %arg0, %c0_i32 : i32, i32
  }
  func.func @transform_1(%arg0: i32) -> (i32, i32) {
    %c0_i32 = arith.constant 0 : i32
    %c0_i32_0 = arith.constant 0 : i32
    %c0_i32_1 = arith.constant 0 : i32
    return %c0_i32, %c0_i32_0 : i32, i32
  }
  func.func @transform_2(%arg0: i32) -> (i32, i32) {
    %c0_i32 = arith.constant 0 : i32
    %c0_i32_0 = arith.constant 0 : i32
    %c0_i32_1 = arith.constant 0 : i32
    return %c0_i32, %c0_i32_0 : i32, i32
  }
  func.func @transform_3(%arg0: i32) -> (i32, i32) {
    %c0_i32 = arith.constant 0 : i32
    %c0_i32_0 = arith.constant 0 : i32
    %c0_i32_1 = arith.constant 0 : i32
    return %c0_i32, %c0_i32_0 : i32, i32
  }
  func.func @transform_4(%arg0: i32) -> (i32, i32) {
    %c0_i32 = arith.constant 0 : i32
    %c0_i32_0 = arith.constant 0 : i32
    return %arg0, %c0_i32 : i32, i32
  }
  func.func @transform_5(%arg0: i32) -> (i32, i32) {
    %c0_i32 = arith.constant 0 : i32
    %c0_i32_0 = arith.constant 0 : i32
    return %arg0, %c0_i32 : i32, i32
  }
}

</mosaic_0001>

<llo_original>
// kernel: soft_attention.1
$region0: #{soft_attention.1}
  #allocation0 [shape = 'u32[]', space=smem, size = 0x4, offset = 0x4, fixed_abs, tag = 'smem constant byte address 0x4 - core index']
  #allocation1 [shape = 'u32[144,128]{1,0:T(1,128)}', space=vmem, size = 0x12000, scoped, tag = 'internal scratch']
  %s0 = inlined_call_operand.vmem [shape: f32[16,1600], index: 0, kind: input, shape index: {}]
  %s1 = inlined_call_operand.vmem [shape: bf16[32,1600], index: 1, kind: input, shape index: {}]
  %s2 = inlined_call_operand.vmem [shape: f32[1,32], index: 2, kind: input, shape index: {}]
  %s3 = inlined_call_operand.vmem [shape: f32[4,32], index: 3, kind: input, shape index: {}]
  %s4 = inlined_call_operand.vmem [shape: f32[16,400], index: 4, kind: output, shape index: {0}]
  %s5 = inlined_call_operand.vmem [shape: f32[16,4], index: 5, kind: output, shape index: {1}]
  %6 = xla_tuple %s4, %s5
  %s7 = sld [smem:[#allocation0]]
  $region57: #{soft_attention.1} parent=0
    _
  %s9 = ssub.s32 1, %s7
  %s10 = scalar_select 0, %s9, %s7
  loop: start=0, step=1, limit=4
  $region2: #{soft_attention.1} parent=0 // loop_pre_header
    _
  $region3: #{soft_attention.1} parent=0 // loop_header
    %s12 = sphi 0, %s16
    %p13 = scmp.ge.s32.totalorder %s12, 4
    %s22 = sphi 0, %s24
    %s25 = sphi 0, %s22
    %s26 = sphi 0, %s25
    %s42 = sphi 0, %s26
    %s46 = sphi 0, %s46
    %s48 = sphi 0, %s46
    %s49 = sphi 0, %s48
    %s63 = sphi 0, %s49
    %s67 = sphi 0, %s67
    %s69 = sphi 0, %s67
    %s70 = sphi 0, %s69
    %s84 = sphi 0, %s70
    %s88 = sphi 0, %s88
    %s90 = sphi 0, %s88
    %s91 = sphi 0, %s90
    %s105 = sphi 0, %s91
    %s111 = sphi 0, %s113
    %s114 = sphi 0, %s111
    %s115 = sphi 0, %s114
    %s131 = sphi 0, %s115
    %s137 = sphi 0, %s139
    %s140 = sphi 0, %s137
    %s141 = sphi 0, %s140
    %s157 = sphi 0, %s141
  $region4: #{soft_attention.1} parent=0 // loop_header_branch
    %15 = sbr.rel (%p13) target = $region8
  $region5: #{soft_attention.1} parent=0 // loop_body
    %s17 = ssub.s32 %s12, 1
    %s18 = ssub.s32 %s12, 2
    %s19 = sadd.s32 %s12, 1
    %s20 = ssub.s32 %s12, %s19
    %p21 = scmp.eq.s32.totalorder %s20, 0
    %s23 = sadd.s32 %s22, 1
    %s24 = scalar_select %p21, %s22, %s23
    %p27 = pneg %p21
    %p28 = scmp.eq.s32.totalorder %s12, 1
    %p29 = por %p27, %p28
    %p30 = scmp.ne.s32.totalorder %s22, %s25
    %p31 = scmp.eq.s32.totalorder %s12, 0
    %p32 = por %p30, %p31
    %p33 = scmp.ne.s32.totalorder %s22, %s25
    %p34 = scmp.eq.s32.totalorder %s17, 1
    %p35 = por %p33, %p34
    %p36 = scmp.ne.s32.totalorder %s25, %s26
    %p37 = scmp.eq.s32.totalorder %s17, 0
    %p38 = por %p36, %p37
    %p39 = scmp.ne.s32.totalorder %s25, %s26
    %p40 = scmp.eq.s32.totalorder %s18, 1
    %p41 = por %p39, %p40
    %p43 = scmp.ne.s32.totalorder %s26, %s42
    %p44 = scmp.eq.s32.totalorder %s18, 0
    %p45 = por %p43, %p44
    %s47 = sadd.s32 %s46, 1
    %p50 = scmp.eq.s32.totalorder %s12, 1
    %p51 = scmp.ne.s32.totalorder %s46, %s48
    %p52 = scmp.eq.s32.totalorder %s12, 0
    %p53 = por %p51, %p52
    %p54 = scmp.ne.s32.totalorder %s46, %s48
    %p55 = scmp.eq.s32.totalorder %s17, 1
    %p56 = por %p54, %p55
    %p57 = scmp.ne.s32.totalorder %s48, %s49
    %p58 = scmp.eq.s32.totalorder %s17, 0
    %p59 = por %p57, %p58
    %p60 = scmp.ne.s32.totalorder %s48, %s49
    %p61 = scmp.eq.s32.totalorder %s18, 1
    %p62 = por %p60, %p61
    %p64 = scmp.ne.s32.totalorder %s49, %s63
    %p65 = scmp.eq.s32.totalorder %s18, 0
    %p66 = por %p64, %p65
    %s68 = sadd.s32 %s67, 1
    %p71 = scmp.eq.s32.totalorder %s12, 1
    %p72 = scmp.ne.s32.totalorder %s67, %s69
    %p73 = scmp.eq.s32.totalorder %s12, 0
    %p74 = por %p72, %p73
    %p75 = scmp.ne.s32.totalorder %s67, %s69
    %p76 = scmp.eq.s32.totalorder %s17, 1
    %p77 = por %p75, %p76
    %p78 = scmp.ne.s32.totalorder %s69, %s70
    %p79 = scmp.eq.s32.totalorder %s17, 0
    %p80 = por %p78, %p79
    %p81 = scmp.ne.s32.totalorder %s69, %s70
    %p82 = scmp.eq.s32.totalorder %s18, 1
    %p83 = por %p81, %p82
    %p85 = scmp.ne.s32.totalorder %s70, %s84
    %p86 = scmp.eq.s32.totalorder %s18, 0
    %p87 = por %p85, %p86
    %s89 = sadd.s32 %s88, 1
    %p92 = scmp.eq.s32.totalorder %s12, 1
    %p93 = scmp.ne.s32.totalorder %s88, %s90
    %p94 = scmp.eq.s32.totalorder %s12, 0
    %p95 = por %p93, %p94
    %p96 = scmp.ne.s32.totalorder %s88, %s90
    %p97 = scmp.eq.s32.totalorder %s17, 1
    %p98 = por %p96, %p97
    %p99 = scmp.ne.s32.totalorder %s90, %s91
    %p100 = scmp.eq.s32.totalorder %s17, 0
    %p101 = por %p99, %p100
    %p102 = scmp.ne.s32.totalorder %s90, %s91
    %p103 = scmp.eq.s32.totalorder %s18, 1
    %p104 = por %p102, %p103
    %p106 = scmp.ne.s32.totalorder %s91, %s105
    %p107 = scmp.eq.s32.totalorder %s18, 0
    %p108 = por %p106, %p107
    %s109 = ssub.s32 %s12, %s19
    %p110 = scmp.eq.s32.totalorder %s109, 0
    %s112 = sadd.s32 %s111, 1
    %s113 = scalar_select %p110, %s111, %s112
    %p116 = pneg %p110
    %p117 = scmp.eq.s32.totalorder %s12, 1
    %p118 = por %p116, %p117
    %p119 = scmp.ne.s32.totalorder %s111, %s114
    %p120 = scmp.eq.s32.totalorder %s12, 0
    %p121 = por %p119, %p120
    %p122 = scmp.ne.s32.totalorder %s111, %s114
    %p123 = scmp.eq.s32.totalorder %s17, 1
    %p124 = por %p122, %p123
    %p125 = scmp.ne.s32.totalorder %s114, %s115
    %p126 = scmp.eq.s32.totalorder %s17, 0
    %p127 = por %p125, %p126
    %p128 = scmp.ne.s32.totalorder %s114, %s115
    %p129 = scmp.eq.s32.totalorder %s18, 1
    %p130 = por %p128, %p129
    %p132 = scmp.ne.s32.totalorder %s115, %s131
    %p133 = scmp.eq.s32.totalorder %s18, 0
    %p134 = por %p132, %p133
    %s135 = ssub.s32 %s12, %s19
    %p136 = scmp.eq.s32.totalorder %s135, 0
    %s138 = sadd.s32 %s137, 1
    %s139 = scalar_select %p136, %s137, %s138
    %p142 = pneg %p136
    %p143 = scmp.eq.s32.totalorder %s12, 1
    %p144 = por %p142, %p143
    %p145 = scmp.ne.s32.totalorder %s137, %s140
    %p146 = scmp.eq.s32.totalorder %s12, 0
    %p147 = por %p145, %p146
    %p148 = scmp.ne.s32.totalorder %s137, %s140
    %p149 = scmp.eq.s32.totalorder %s17, 1
    %p150 = por %p148, %p149
    %p151 = scmp.ne.s32.totalorder %s140, %s141
    %p152 = scmp.eq.s32.totalorder %s17, 0
    %p153 = por %p151, %p152
    %p154 = scmp.ne.s32.totalorder %s140, %s141
    %p155 = scmp.eq.s32.totalorder %s18, 1
    %p156 = por %p154, %p155
    %p158 = scmp.ne.s32.totalorder %s141, %s157
    %p159 = scmp.eq.s32.totalorder %s18, 0
    %p160 = por %p158, %p159
    %p161 = scmp.le.s32.totalorder 1, %s12
    %p162 = scmp.lt.s32.totalorder %s12, 3
    %p163 = pnand %p161, %p162
    %p164 = pneg %p163
    // Predicated region
    $region9: #{soft_attention.1} parent=5 // pred_check
      _
    $region10: #{soft_attention.1} parent=5 // pred_check_branch
      %166 = sbr.rel (%p163) target = $region12
    $region11: #{soft_attention.1} parent=5 // pred_region
      %s167 = ssub.s32 %s12, 1
      // Predicated region
      $region13: #{soft_attention.1} parent=11 // pred_check
        %p168 = pneg %p59
      $region14: #{soft_attention.1} parent=11 // pred_check_branch
        %170 = sbr.rel (%p168) target = $region16
      $region15: #{soft_attention.1} parent=11 // pred_region
        _
      $region16: #{soft_attention.1} parent=11 // pred_fallthru
        _
      // Predicated region
      $region17: #{soft_attention.1} parent=11 // pred_check
        %p171 = pneg %p80
      $region18: #{soft_attention.1} parent=11 // pred_check_branch
        %173 = sbr.rel (%p171) target = $region20
      $region19: #{soft_attention.1} parent=11 // pred_region
        _
      $region20: #{soft_attention.1} parent=11 // pred_fallthru
        _
      // Predicated region
      $region21: #{soft_attention.1} parent=11 // pred_check
        %p174 = pneg %p101
      $region22: #{soft_attention.1} parent=11 // pred_check_branch
        %176 = sbr.rel (%p174) target = $region24
      $region23: #{soft_attention.1} parent=11 // pred_region
        _
      $region24: #{soft_attention.1} parent=11 // pred_fallthru
        _
    $region12: #{soft_attention.1} parent=5 // pred_fallthru
      _
    %p177 = scmp.lt.s32.totalorder %s12, 2
    // Predicated region
    $region25: #{soft_attention.1} parent=5 // pred_check
      %p178 = pneg %p177
    $region26: #{soft_attention.1} parent=5 // pred_check_branch
      %180 = sbr.rel (%p178) target = $region28
    $region27: #{soft_attention.1} parent=5 // pred_region
      // Predicated region
      $region29: #{soft_attention.1} parent=27 // pred_check
        %p181 = pneg %p32
      $region30: #{soft_attention.1} parent=27 // pred_check_branch
        %183 = sbr.rel (%p181) target = $region32
      $region31: #{soft_attention.1} parent=27 // pred_region
        %p184 = scmp.lt.s32.totalorder %s12, 1
        %s185 = scalar_select %p184, %s12, 1
        %s186 = smul.addr %s185, 13
        %s187 = smul.addr %s186, 8
        %s188 = scalar_lea.vmem %s0, %s187
      $region32: #{soft_attention.1} parent=27 // pred_fallthru
        _
    $region28: #{soft_attention.1} parent=5 // pred_fallthru
      _
    %p189 = scmp.le.s32.totalorder 1, %s12
    %p190 = scmp.lt.s32.totalorder %s12, 3
    %p191 = pnand %p189, %p190
    %p192 = pneg %p191
    // Predicated region
    $region33: #{soft_attention.1} parent=5 // pred_check
      _
    $region34: #{soft_attention.1} parent=5 // pred_check_branch
      %194 = sbr.rel (%p191) target = $region36
    $region35: #{soft_attention.1} parent=5 // pred_region
      %s195 = ssub.s32 %s12, 1
      %p196 = scmp.lt.s32.totalorder %s17, 1
      %s197 = scalar_select %p196, %s17, 1
      %s198 = smul.addr %s197, 13
      %s199 = smul.addr %s198, 8
      %s200 = scalar_lea.vmem %s0, %s199
      %p201 = pneg %p38
      %p202 = pneg %p35
      %p203 = pneg %p59
      %p204 = pneg %p56
      %p205 = pneg %p80
      %p206 = pneg %p77
      %p207 = pneg %p101
      %p208 = pneg %p98
      %p209 = pneg %p127
      %p210 = pneg %p124
      %p211 = scmp.lt.s32.totalorder %s17, 1
      %s212 = scalar_select %p211, %s17, 1
      %s213 = smul.addr %s212, 4
      %s214 = smul.addr %s213, 8
      %s215 = scalar_lea.vmem %s4, %s214
      %p216 = pneg %p153
      %p217 = pneg %p150
      %p218 = scmp.lt.s32.totalorder %s17, 1
      %s219 = scalar_select %p218, %s17, 1
      %s220 = smul.addr %s219, 8
      %s221 = scalar_lea.vmem %s5, %s220
      %p222 = scmp.lt.s32.totalorder %s17, 1
      %s223 = scalar_select %p222, %s17, 1
      %s224 = smul.addr %s223, 13
      %s225 = smul.addr %s224, 8
      %s226 = scalar_lea.vmem %s0, %s225
      %p227 = scmp.lt.s32.totalorder %s17, 1
      %s228 = scalar_select %p227, %s17, 1
      %s229 = smul.addr %s228, 4
      %s230 = smul.addr %s229, 8
      %s231 = scalar_lea.vmem %s4, %s230
      %p232 = scmp.lt.s32.totalorder %s17, 1
      %s233 = scalar_select %p232, %s17, 1
      %s234 = smul.addr %s233, 8
      %s235 = scalar_lea.vmem %s5, %s234
      %v237 = vld [vmem:[%s226] sm:$0xff]
      %v238 = vld [vmem:[%s226 + $0x8] sm:$0xff]
      %v239 = vld [vmem:[%s226 + $0x10] sm:$0xff]
      %v240 = vld [vmem:[%s226 + $0x18] sm:$0xff]
      %v241 = vld [vmem:[%s226 + $0x20] sm:$0xff]
      %v242 = vld [vmem:[%s226 + $0x28] sm:$0xff]
      %v243 = vld [vmem:[%s226 + $0x30] sm:$0xff]
      %v244 = vld [vmem:[%s226 + $0x38] sm:$0xff]
      %v245 = vld [vmem:[%s226 + $0x40] sm:$0xff]
      %v246 = vld [vmem:[%s226 + $0x48] sm:$0xff]
      %v247 = vld [vmem:[%s226 + $0x50] sm:$0xff]
      %v248 = vld [vmem:[%s226 + $0x58] sm:$0xff]
      %v249 = vld [vmem:[%s226 + $0x60] sm:$0xff]
      %v250 = vpack.c.bf16 %v237, %v237
      %v251 = vpack.c.bf16 %v238, %v238
      %v252 = vpack.c.bf16 %v239, %v239
      %v253 = vpack.c.bf16 %v240, %v240
      %v254 = vpack.c.bf16 %v241, %v241
      %v255 = vpack.c.bf16 %v242, %v242
      %v256 = vpack.c.bf16 %v243, %v243
      %v257 = vpack.c.bf16 %v244, %v244
      %v258 = vpack.c.bf16 %v245, %v245
      %v259 = vpack.c.bf16 %v246, %v246
      %v260 = vpack.c.bf16 %v247, %v247
      %v261 = vpack.c.bf16 %v248, %v248
      %v262 = vpack.c.bf16 %v249, %v249
      %v263 = vld [vmem:[%s1] sm:$0xff]
      %v264 = vld [vmem:[%s1 + $0x8] sm:$0xff]
      %v265 = vld [vmem:[%s1 + $0x10] sm:$0xff]
      %v266 = vld [vmem:[%s1 + $0x18] sm:$0xff]
      %v267 = vld [vmem:[%s1 + $0x20] sm:$0xff]
      %v268 = vld [vmem:[%s1 + $0x28] sm:$0xff]
      %v269 = vld [vmem:[%s1 + $0x30] sm:$0xf]
      %v270 = vld [vmem:[%s1 + $0x34] sm:$0xff]
      %v271 = vld [vmem:[%s1 + $0x3c] sm:$0xff]
      %v272 = vld [vmem:[%s1 + $0x44] sm:$0xff]
      %v273 = vld [vmem:[%s1 + $0x4c] sm:$0xff]
      %v274 = vld [vmem:[%s1 + $0x54] sm:$0xff]
      %v275 = vld [vmem:[%s1 + $0x5c] sm:$0xff]
      %v276 = vld [vmem:[%s1 + $0x64] sm:$0xf]
      %v277 = vld [vmem:[%s1 + $0x68] sm:$0xff]
      %v278 = vld [vmem:[%s1 + $0x70] sm:$0xff]
      %v279 = vld [vmem:[%s1 + $0x78] sm:$0xff]
      %v280 = vld [vmem:[%s1 + $0x80] sm:$0xff]
      %v281 = vld [vmem:[%s1 + $0x88] sm:$0xff]
      %v282 = vld [vmem:[%s1 + $0x90] sm:$0xff]
      %v283 = vld [vmem:[%s1 + $0x98] sm:$0xf]
      %v284 = vld [vmem:[%s1 + $0x9c] sm:$0xff]
      %v285 = vld [vmem:[%s1 + $0xa4] sm:$0xff]
      %v286 = vld [vmem:[%s1 + $0xac] sm:$0xff]
      %v287 = vld [vmem:[%s1 + $0xb4] sm:$0xff]
      %v288 = vld [vmem:[%s1 + $0xbc] sm:$0xff]
      %v289 = vld [vmem:[%s1 + $0xc4] sm:$0xff]
      %v290 = vld [vmem:[%s1 + $0xcc] sm:$0xf]
      %v291 = vld [vmem:[%s2] sm:$0x1]
      %v293 = vlaneseq
      %v294 = vshrl.u32 %v293, 7
      %v295 = vsub.s32 0, %v294
      %v296 = vrot.slane %v291, %v295
      %v326 = vunpack.c.l.b16 %v263
      %v327 = vunpack.c.h.b16 %v263
      %v328 = vunpack.c.l.b16 %v264
      %v329 = vunpack.c.h.b16 %v264
      %v330 = vunpack.c.l.b16 %v265
      %v331 = vunpack.c.h.b16 %v265
      %v332 = vunpack.c.l.b16 %v266
      %v333 = vunpack.c.h.b16 %v266
      %v334 = vunpack.c.l.b16 %v267
      %v335 = vunpack.c.h.b16 %v267
      %v336 = vunpack.c.l.b16 %v268
      %v337 = vunpack.c.h.b16 %v268
      %v338 = vunpack.c.l.b16 %v269
      %v339 = vunpack.c.l.b16 %v270
      %v340 = vunpack.c.h.b16 %v270
      %v341 = vunpack.c.l.b16 %v271
      %v342 = vunpack.c.h.b16 %v271
      %v343 = vunpack.c.l.b16 %v272
      %v344 = vunpack.c.h.b16 %v272
      %v345 = vunpack.c.l.b16 %v273
      %v346 = vunpack.c.h.b16 %v273
      %v347 = vunpack.c.l.b16 %v274
      %v348 = vunpack.c.h.b16 %v274
      %v349 = vunpack.c.l.b16 %v275
      %v350 = vunpack.c.h.b16 %v275
      %v351 = vunpack.c.l.b16 %v276
      %v352 = vunpack.c.l.b16 %v277
      %v353 = vunpack.c.h.b16 %v277
      %v354 = vunpack.c.l.b16 %v278
      %v355 = vunpack.c.h.b16 %v278
      %v356 = vunpack.c.l.b16 %v279
      %v357 = vunpack.c.h.b16 %v279
      %v358 = vunpack.c.l.b16 %v280
      %v359 = vunpack.c.h.b16 %v280
      %v360 = vunpack.c.l.b16 %v281
      %v361 = vunpack.c.h.b16 %v281
      %v362 = vunpack.c.l.b16 %v282
      %v363 = vunpack.c.h.b16 %v282
      %v364 = vunpack.c.l.b16 %v283
      %v365 = vunpack.c.l.b16 %v284
      %v366 = vunpack.c.h.b16 %v284
      %v367 = vunpack.c.l.b16 %v285
      %v368 = vunpack.c.h.b16 %v285
      %v369 = vunpack.c.l.b16 %v286
      %v370 = vunpack.c.h.b16 %v286
      %v371 = vunpack.c.l.b16 %v287
      %v372 = vunpack.c.h.b16 %v287
      %v373 = vunpack.c.l.b16 %v288
      %v374 = vunpack.c.h.b16 %v288
      %v375 = vunpack.c.l.b16 %v289
      %v376 = vunpack.c.h.b16 %v289
      %v377 = vunpack.c.l.b16 %v290
      %v378 = vpack.c.b16 %v339, %v326
      %v379 = vpack.c.b16 %v340, %v327
      %v380 = vpack.c.b16 %v341, %v328
      %v381 = vpack.c.b16 %v342, %v329
      %v382 = vpack.c.b16 %v343, %v330
      %v383 = vpack.c.b16 %v344, %v331
      %v384 = vpack.c.b16 %v345, %v332
      %v385 = vpack.c.b16 %v346, %v333
      %v386 = vpack.c.b16 %v347, %v334
      %v387 = vpack.c.b16 %v348, %v335
      %v388 = vpack.c.b16 %v349, %v336
      %v389 = vpack.c.b16 %v350, %v337
      %v390 = vpack.c.b16 %v351, %v338
      %v391 = vpack.c.b16 %v365, %v352
      %v392 = vpack.c.b16 %v366, %v353
      %v393 = vpack.c.b16 %v367, %v354
      %v394 = vpack.c.b16 %v368, %v355
      %v395 = vpack.c.b16 %v369, %v356
      %v396 = vpack.c.b16 %v370, %v357
      %v397 = vpack.c.b16 %v371, %v358
      %v398 = vpack.c.b16 %v372, %v359
      %v399 = vpack.c.b16 %v373, %v360
      %v400 = vpack.c.b16 %v374, %v361
      %v401 = vpack.c.b16 %v375, %v362
      %v402 = vpack.c.b16 %v376, %v363
      %v403 = vpack.c.b16 %v377, %v364
      %vm428 = vcmask 523264
      %v430 = vsel %vm428, %v262, 0
      %v433 = vsel %vm428, %v390, 0
      %v436 = vsel %vm428, %v403, 0
      %438 = vmatprep.subr.bf16.mxu0 %v379
      %439 = vmatpush1.bf16.xpose.msra.mxu0 %v378
      %440 = vmatprep.subr.bf16.mxu0 %v392
      %441 = vmatpush1.bf16.xpose.msra.mxu0 %v391
      %442 = vmatprep.subr.bf16.mxu0 0
      %443 = vmatpush1.bf16.xpose.msra.mxu0 0
      %444 = vmatprep.subr.bf16.mxu0 0
      %445 = vmatpush1.bf16.xpose.msra.mxu0 0
      %446 = vmatprep.subr.bf16.mxu0 0
      %447 = vmatpush1.bf16.xpose.msra.mxu0 0
      %448 = vmatprep.subr.bf16.mxu0 0
      %449 = vmatpush1.bf16.xpose.msra.mxu0 0
      %450 = vmatprep.subr.bf16.mxu0 0
      %451 = vmatpush1.bf16.xpose.msra.mxu0 0
      %452 = vmatprep.subr.bf16.mxu0 0
      %453 = vmatpush1.bf16.xpose.msra.mxu0 0
      %454 = vmatprep.subr.bf16.mxu0 0
      %455 = vmatpush1.bf16.xpose.msra.mxu0 0
      %456 = vmatprep.subr.bf16.mxu0 0
      %457 = vmatpush1.bf16.xpose.msra.mxu0 0
      %458 = vmatprep.subr.bf16.mxu0 0
      %459 = vmatpush1.bf16.xpose.msra.mxu0 0
      %460 = vmatprep.subr.bf16.mxu0 0
      %461 = vmatpush1.bf16.xpose.msra.mxu0 0
      %462 = vmatprep.subr.bf16.mxu0 0
      %463 = vmatpush1.bf16.xpose.msra.mxu0 0
      %464 = vmatprep.subr.bf16.mxu0 0
      %465 = vmatpush1.bf16.xpose.msra.mxu0 0
      %466 = vmatprep.subr.bf16.mxu0 0
      %467 = vmatpush1.bf16.xpose.msra.mxu0 0
      %468 = vmatprep.subr.bf16.mxu0 0
      %469 = vmatpush1.bf16.xpose.msra.mxu0 0
      %470 = vmatprep.mubr.bf16.mxu0 %v251
      %471 = vmatmul.mubr.bf16.gmra.mrb[0].mxu0 %v250
      %v472 = vpop.f32.mrb[0].mxu0
      %v473 = vadd.f32 %v296, %v472
      %v474 = vpop.f32.mrb[0].mxu0
      %v475 = vpop.f32.mrb[0].mxu0
      %v476 = vpop.f32.mrb[0].mxu0
      %477 = vdwg.mxu0
      %478 = vmatprep.subr.bf16.mxu0 %v381
      %479 = vmatpush1.bf16.xpose.msra.mxu0 %v380
      %480 = vmatprep.subr.bf16.mxu0 %v394
      %481 = vmatpush1.bf16.xpose.msra.mxu0 %v393
      %482 = vmatprep.subr.bf16.mxu0 0
      %483 = vmatpush1.bf16.xpose.msra.mxu0 0
      %484 = vmatprep.subr.bf16.mxu0 0
      %485 = vmatpush1.bf16.xpose.msra.mxu0 0
      %486 = vmatprep.subr.bf16.mxu0 0
      %487 = vmatpush1.bf16.xpose.msra.mxu0 0
      %488 = vmatprep.subr.bf16.mxu0 0
      %489 = vmatpush1.bf16.xpose.msra.mxu0 0
      %490 = vmatprep.subr.bf16.mxu0 0
      %491 = vmatpush1.bf16.xpose.msra.mxu0 0
      %492 = vmatprep.subr.bf16.mxu0 0
      %493 = vmatpush1.bf16.xpose.msra.mxu0 0
      %494 = vmatprep.subr.bf16.mxu0 0
      %495 = vmatpush1.bf16.xpose.msra.mxu0 0
      %496 = vmatprep.subr.bf16.mxu0 0
      %497 = vmatpush1.bf16.xpose.msra.mxu0 0
      %498 = vmatprep.subr.bf16.mxu0 0
      %499 = vmatpush1.bf16.xpose.msra.mxu0 0
      %500 = vmatprep.subr.bf16.mxu0 0
      %501 = vmatpush1.bf16.xpose.msra.mxu0 0
      %502 = vmatprep.subr.bf16.mxu0 0
      %503 = vmatpush1.bf16.xpose.msra.mxu0 0
      %504 = vmatprep.subr.bf16.mxu0 0
      %505 = vmatpush1.bf16.xpose.msra.mxu0 0
      %506 = vmatprep.subr.bf16.mxu0 0
      %507 = vmatpush1.bf16.xpose.msra.mxu0 0
      %508 = vmatprep.subr.bf16.mxu0 0
      %509 = vmatpush1.bf16.xpose.msra.mxu0 0
      %510 = vmatprep.mubr.bf16.mxu0 %v253
      %511 = vmatmul.mubr.bf16.gmra.mrb[0].mxu0 %v252
      %v512 = vpop.f32.mrb[0].mxu0
      %v513 = vadd.f32 %v473, %v512
      %v514 = vpop.f32.mrb[0].mxu0
      %v515 = vpop.f32.mrb[0].mxu0
      %v516 = vpop.f32.mrb[0].mxu0
      %517 = vdwg.mxu0
      %518 = vmatprep.subr.bf16.mxu0 %v383
      %519 = vmatpush1.bf16.xpose.msra.mxu0 %v382
      %520 = vmatprep.subr.bf16.mxu0 %v396
      %521 = vmatpush1.bf16.xpose.msra.mxu0 %v395
      %522 = vmatprep.subr.bf16.mxu0 0
      %523 = vmatpush1.bf16.xpose.msra.mxu0 0
      %524 = vmatprep.subr.bf16.mxu0 0
      %525 = vmatpush1.bf16.xpose.msra.mxu0 0
      %526 = vmatprep.subr.bf16.mxu0 0
      %527 = vmatpush1.bf16.xpose.msra.mxu0 0
      %528 = vmatprep.subr.bf16.mxu0 0
      %529 = vmatpush1.bf16.xpose.msra.mxu0 0
      %530 = vmatprep.subr.bf16.mxu0 0
      %531 = vmatpush1.bf16.xpose.msra.mxu0 0
      %532 = vmatprep.subr.bf16.mxu0 0
      %533 = vmatpush1.bf16.xpose.msra.mxu0 0
      %534 = vmatprep.subr.bf16.mxu0 0
      %535 = vmatpush1.bf16.xpose.msra.mxu0 0
      %536 = vmatprep.subr.bf16.mxu0 0
      %537 = vmatpush1.bf16.xpose.msra.mxu0 0
      %538 = vmatprep.subr.bf16.mxu0 0
      %539 = vmatpush1.bf16.xpose.msra.mxu0 0
      %540 = vmatprep.subr.bf16.mxu0 0
      %541 = vmatpush1.bf16.xpose.msra.mxu0 0
      %542 = vmatprep.subr.bf16.mxu0 0
      %543 = vmatpush1.bf16.xpose.msra.mxu0 0
      %544 = vmatprep.subr.bf16.mxu0 0
      %545 = vmatpush1.bf16.xpose.msra.mxu0 0
      %546 = vmatprep.subr.bf16.mxu0 0
      %547 = vmatpush1.bf16.xpose.msra.mxu0 0
      %548 = vmatprep.subr.bf16.mxu0 0
      %549 = vmatpush1.bf16.xpose.msra.mxu0 0
      %550 = vmatprep.mubr.bf16.mxu0 %v255
      %551 = vmatmul.mubr.bf16.gmra.mrb[0].mxu0 %v254
      %v552 = vpop.f32.mrb[0].mxu0
      %v553 = vadd.f32 %v513, %v552
      %v554 = vpop.f32.mrb[0].mxu0
      %v555 = vpop.f32.mrb[0].mxu0
      %v556 = vpop.f32.mrb[0].mxu0
      %557 = vdwg.mxu0
      %558 = vmatprep.subr.bf16.mxu0 %v385
      %559 = vmatpush1.bf16.xpose.msra.mxu0 %v384
      %560 = vmatprep.subr.bf16.mxu0 %v398
      %561 = vmatpush1.bf16.xpose.msra.mxu0 %v397
      %562 = vmatprep.subr.bf16.mxu0 0
      %563 = vmatpush1.bf16.xpose.msra.mxu0 0
      %564 = vmatprep.subr.bf16.mxu0 0
      %565 = vmatpush1.bf16.xpose.msra.mxu0 0
      %566 = vmatprep.subr.bf16.mxu0 0
      %567 = vmatpush1.bf16.xpose.msra.mxu0 0
      %568 = vmatprep.subr.bf16.mxu0 0
      %569 = vmatpush1.bf16.xpose.msra.mxu0 0
      %570 = vmatprep.subr.bf16.mxu0 0
      %571 = vmatpush1.bf16.xpose.msra.mxu0 0
      %572 = vmatprep.subr.bf16.mxu0 0
      %573 = vmatpush1.bf16.xpose.msra.mxu0 0
      %574 = vmatprep.subr.bf16.mxu0 0
      %575 = vmatpush1.bf16.xpose.msra.mxu0 0
      %576 = vmatprep.subr.bf16.mxu0 0
      %577 = vmatpush1.bf16.xpose.msra.mxu0 0
      %578 = vmatprep.subr.bf16.mxu0 0
      %579 = vmatpush1.bf16.xpose.msra.mxu0 0
      %580 = vmatprep.subr.bf16.mxu0 0
      %581 = vmatpush1.bf16.xpose.msra.mxu0 0
      %582 = vmatprep.subr.bf16.mxu0 0
      %583 = vmatpush1.bf16.xpose.msra.mxu0 0
      %584 = vmatprep.subr.bf16.mxu0 0
      %585 = vmatpush1.bf16.xpose.msra.mxu0 0
      %586 = vmatprep.subr.bf16.mxu0 0
      %587 = vmatpush1.bf16.xpose.msra.mxu0 0
      %588 = vmatprep.subr.bf16.mxu0 0
      %589 = vmatpush1.bf16.xpose.msra.mxu0 0
      %590 = vmatprep.mubr.bf16.mxu0 %v257
      %591 = vmatmul.mubr.bf16.gmra.mrb[0].mxu0 %v256
      %v592 = vpop.f32.mrb[0].mxu0
      %v593 = vadd.f32 %v553, %v592
      %v594 = vpop.f32.mrb[0].mxu0
      %v595 = vpop.f32.mrb[0].mxu0
      %v596 = vpop.f32.mrb[0].mxu0
      %597 = vdwg.mxu0
      %598 = vmatprep.subr.bf16.mxu0 %v387
      %599 = vmatpush1.bf16.xpose.msra.mxu0 %v386
      %600 = vmatprep.subr.bf16.mxu0 %v400
      %601 = vmatpush1.bf16.xpose.msra.mxu0 %v399
      %602 = vmatprep.subr.bf16.mxu0 0
      %603 = vmatpush1.bf16.xpose.msra.mxu0 0
      %604 = vmatprep.subr.bf16.mxu0 0
      %605 = vmatpush1.bf16.xpose.msra.mxu0 0
      %606 = vmatprep.subr.bf16.mxu0 0
      %607 = vmatpush1.bf16.xpose.msra.mxu0 0
      %608 = vmatprep.subr.bf16.mxu0 0
      %609 = vmatpush1.bf16.xpose.msra.mxu0 0
      %610 = vmatprep.subr.bf16.mxu0 0
      %611 = vmatpush1.bf16.xpose.msra.mxu0 0
      %612 = vmatprep.subr.bf16.mxu0 0
      %613 = vmatpush1.bf16.xpose.msra.mxu0 0
      %614 = vmatprep.subr.bf16.mxu0 0
      %615 = vmatpush1.bf16.xpose.msra.mxu0 0
      %616 = vmatprep.subr.bf16.mxu0 0
      %617 = vmatpush1.bf16.xpose.msra.mxu0 0
      %618 = vmatprep.subr.bf16.mxu0 0
      %619 = vmatpush1.bf16.xpose.msra.mxu0 0
      %620 = vmatprep.subr.bf16.mxu0 0
      %621 = vmatpush1.bf16.xpose.msra.mxu0 0
      %622 = vmatprep.subr.bf16.mxu0 0
      %623 = vmatpush1.bf16.xpose.msra.mxu0 0
      %624 = vmatprep.subr.bf16.mxu0 0
      %625 = vmatpush1.bf16.xpose.msra.mxu0 0
      %626 = vmatprep.subr.bf16.mxu0 0
      %627 = vmatpush1.bf16.xpose.msra.mxu0 0
      %628 = vmatprep.subr.bf16.mxu0 0
      %629 = vmatpush1.bf16.xpose.msra.mxu0 0
      %630 = vmatprep.mubr.bf16.mxu0 %v259
      %631 = vmatmul.mubr.bf16.gmra.mrb[0].mxu0 %v258
      %v632 = vpop.f32.mrb[0].mxu0
      %v633 = vadd.f32 %v593, %v632
      %v634 = vpop.f32.mrb[0].mxu0
      %v635 = vpop.f32.mrb[0].mxu0
      %v636 = vpop.f32.mrb[0].mxu0
      %637 = vdwg.mxu0
      %638 = vmatprep.subr.bf16.mxu0 %v389
      %639 = vmatpush1.bf16.xpose.msra.mxu0 %v388
      %640 = vmatprep.subr.bf16.mxu0 %v402
      %641 = vmatpush1.bf16.xpose.msra.mxu0 %v401
      %642 = vmatprep.subr.bf16.mxu0 0
      %643 = vmatpush1.bf16.xpose.msra.mxu0 0
      %644 = vmatprep.subr.bf16.mxu0 0
      %645 = vmatpush1.bf16.xpose.msra.mxu0 0
      %646 = vmatprep.subr.bf16.mxu0 0
      %647 = vmatpush1.bf16.xpose.msra.mxu0 0
      %648 = vmatprep.subr.bf16.mxu0 0
      %649 = vmatpush1.bf16.xpose.msra.mxu0 0
      %650 = vmatprep.subr.bf16.mxu0 0
      %651 = vmatpush1.bf16.xpose.msra.mxu0 0
      %652 = vmatprep.subr.bf16.mxu0 0
      %653 = vmatpush1.bf16.xpose.msra.mxu0 0
      %654 = vmatprep.subr.bf16.mxu0 0
      %655 = vmatpush1.bf16.xpose.msra.mxu0 0
      %656 = vmatprep.subr.bf16.mxu0 0
      %657 = vmatpush1.bf16.xpose.msra.mxu0 0
      %658 = vmatprep.subr.bf16.mxu0 0
      %659 = vmatpush1.bf16.xpose.msra.mxu0 0
      %660 = vmatprep.subr.bf16.mxu0 0
      %661 = vmatpush1.bf16.xpose.msra.mxu0 0
      %662 = vmatprep.subr.bf16.mxu0 0
      %663 = vmatpush1.bf16.xpose.msra.mxu0 0
      %664 = vmatprep.subr.bf16.mxu0 0
      %665 = vmatpush1.bf16.xpose.msra.mxu0 0
      %666 = vmatprep.subr.bf16.mxu0 0
      %667 = vmatpush1.bf16.xpose.msra.mxu0 0
      %668 = vmatprep.subr.bf16.mxu0 0
      %669 = vmatpush1.bf16.xpose.msra.mxu0 0
      %670 = vmatprep.mubr.bf16.mxu0 %v261
      %671 = vmatmul.mubr.bf16.gmra.mrb[0].mxu0 %v260
      %v672 = vpop.f32.mrb[0].mxu0
      %v673 = vadd.f32 %v633, %v672
      %v674 = vpop.f32.mrb[0].mxu0
      %v675 = vpop.f32.mrb[0].mxu0
      %v676 = vpop.f32.mrb[0].mxu0
      %677 = vdwg.mxu0
      %678 = vmatprep.subr.bf16.mxu0 0
      %679 = vmatpush1.bf16.xpose.msra.mxu0 %v433
      %680 = vmatprep.subr.bf16.mxu0 0
      %681 = vmatpush1.bf16.xpose.msra.mxu0 %v436
      %682 = vmatprep.subr.bf16.mxu0 0
      %683 = vmatpush1.bf16.xpose.msra.mxu0 0
      %684 = vmatprep.subr.bf16.mxu0 0
      %685 = vmatpush1.bf16.xpose.msra.mxu0 0
      %686 = vmatprep.subr.bf16.mxu0 0
      %687 = vmatpush1.bf16.xpose.msra.mxu0 0
      %688 = vmatprep.subr.bf16.mxu0 0
      %689 = vmatpush1.bf16.xpose.msra.mxu0 0
      %690 = vmatprep.subr.bf16.mxu0 0
      %691 = vmatpush1.bf16.xpose.msra.mxu0 0
      %692 = vmatprep.subr.bf16.mxu0 0
      %693 = vmatpush1.bf16.xpose.msra.mxu0 0
      %694 = vmatprep.subr.bf16.mxu0 0
      %695 = vmatpush1.bf16.xpose.msra.mxu0 0
      %696 = vmatprep.subr.bf16.mxu0 0
      %697 = vmatpush1.bf16.xpose.msra.mxu0 0
      %698 = vmatprep.subr.bf16.mxu0 0
      %699 = vmatpush1.bf16.xpose.msra.mxu0 0
      %700 = vmatprep.subr.bf16.mxu0 0
      %701 = vmatpush1.bf16.xpose.msra.mxu0 0
      %702 = vmatprep.subr.bf16.mxu0 0
      %703 = vmatpush1.bf16.xpose.msra.mxu0 0
      %704 = vmatprep.subr.bf16.mxu0 0
      %705 = vmatpush1.bf16.xpose.msra.mxu0 0
      %706 = vmatprep.subr.bf16.mxu0 0
      %707 = vmatpush1.bf16.xpose.msra.mxu0 0
      %708 = vmatprep.subr.bf16.mxu0 0
      %709 = vmatpush1.bf16.xpose.msra.mxu0 0
      %710 = vmatprep.mubr.bf16.mxu0 0
      %711 = vmatmul.mubr.bf16.gmra.mrb[0].mxu0 %v430
      %v712 = vpop.f32.mrb[0].mxu0
      %v713 = vadd.f32 %v673, %v712
      %v714 = vpop.f32.mrb[0].mxu0
      %v715 = vpop.f32.mrb[0].mxu0
      %v716 = vpop.f32.mrb[0].mxu0
      %717 = vdwg.mxu0
      %v718 = vmax.f32 %v713, 0.0
      %v719 = vld [vmem:[%s3] sm:$0xf]
      %vm720 = vcmask 261120
      %v722 = vsel %vm720, %v718, 0
      %v725 = vsel %vm720, %v719, 0
      %727 = vmatprep.subr.mxu0 0.0
      %728 = vmatpush1.xpose.msra.mxu0 %v725
      %729 = vmatprep.subr.mxu0 0.0
      %730 = vmatpush1.xpose.msra.mxu0 0.0
      %731 = vmatprep.subr.mxu0 0.0
      %732 = vmatpush1.xpose.msra.mxu0 0.0
      %733 = vmatprep.subr.mxu0 0.0
      %734 = vmatpush1.xpose.msra.mxu0 0.0
      %735 = vmatprep.subr.mxu0 0.0
      %736 = vmatpush1.xpose.msra.mxu0 0.0
      %737 = vmatprep.subr.mxu0 0.0
      %738 = vmatpush1.xpose.msra.mxu0 0.0
      %739 = vmatprep.subr.mxu0 0.0
      %740 = vmatpush1.xpose.msra.mxu0 0.0
      %741 = vmatprep.subr.mxu0 0.0
      %742 = vmatpush1.xpose.msra.mxu0 0.0
      %743 = vmatprep.subr.mxu0 0.0
      %744 = vmatpush1.xpose.msra.mxu0 0.0
      %745 = vmatprep.subr.mxu0 0.0
      %746 = vmatpush1.xpose.msra.mxu0 0.0
      %747 = vmatprep.subr.mxu0 0.0
      %748 = vmatpush1.xpose.msra.mxu0 0.0
      %749 = vmatprep.subr.mxu0 0.0
      %750 = vmatpush1.xpose.msra.mxu0 0.0
      %751 = vmatprep.subr.mxu0 0.0
      %752 = vmatpush1.xpose.msra.mxu0 0.0
      %753 = vmatprep.subr.mxu0 0.0
      %754 = vmatpush1.xpose.msra.mxu0 0.0
      %755 = vmatprep.subr.mxu0 0.0
      %756 = vmatpush1.xpose.msra.mxu0 0.0
      %757 = vmatprep.subr.mxu0 0.0
      %758 = vmatpush1.xpose.msra.mxu0 0.0
      %759 = vmatprep.subr.mxu0 0.0
      %760 = vmatpush1.xpose.msra.mxu0 0.0
      %761 = vmatprep.subr.mxu0 0.0
      %762 = vmatpush1.xpose.msra.mxu0 0.0
      %763 = vmatprep.subr.mxu0 0.0
      %764 = vmatpush1.xpose.msra.mxu0 0.0
      %765 = vmatprep.subr.mxu0 0.0
      %766 = vmatpush1.xpose.msra.mxu0 0.0
      %767 = vmatprep.subr.mxu0 0.0
      %768 = vmatpush1.xpose.msra.mxu0 0.0
      %769 = vmatprep.subr.mxu0 0.0
      %770 = vmatpush1.xpose.msra.mxu0 0.0
      %771 = vmatprep.subr.mxu0 0.0
      %772 = vmatpush1.xpose.msra.mxu0 0.0
      %773 = vmatprep.subr.mxu0 0.0
      %774 = vmatpush1.xpose.msra.mxu0 0.0
      %775 = vmatprep.subr.mxu0 0.0
      %776 = vmatpush1.xpose.msra.mxu0 0.0
      %777 = vmatprep.subr.mxu0 0.0
      %778 = vmatpush1.xpose.msra.mxu0 0.0
      %779 = vmatprep.subr.mxu0 0.0
      %780 = vmatpush1.xpose.msra.mxu0 0.0
      %781 = vmatprep.subr.mxu0 0.0
      %782 = vmatpush1.xpose.msra.mxu0 0.0
      %783 = vmatprep.subr.mxu0 0.0
      %784 = vmatpush1.xpose.msra.mxu0 0.0
      %785 = vmatprep.subr.mxu0 0.0
      %786 = vmatpush1.xpose.msra.mxu0 0.0
      %787 = vmatprep.subr.mxu0 0.0
      %788 = vmatpush1.xpose.msra.mxu0 0.0
      %789 = vmatprep.subr.mxu0 0.0
      %790 = vmatpush1.xpose.msra.mxu0 0.0
      %791 = vmatprep.mubr.f32.mxu0 0.0
      %792 = vmatmul.mubr.f32.gmra.mrb[0].mxu0 %v722
      %v793 = vpop.f32.mrb[0].mxu0
      %v794 = vadd.f32 0.0, %v793
      %v795 = vpop.f32.mrb[0].mxu0
      %796 = vdwg.mxu0
      %v797 = vmax.f32 %v794, 0.0
      %vm798 = vcmask 31744
      %v799 = vsel %vm798, %v797, -inf
      %800 = vmax.xlane.f32.xlu0 %v799
      %v801 = vpop.xlane.xlu0 %800
      %v802 = vsub.f32 %v797, %v801
      %v803 = vmul.f32 %v802, 1.442695
      %v804 = vpow.pop %v803
      %v805 = vsel %vm798, %v804, 0.0
      %806 = vadd.xlane.f32.xlu0 %v805
      %v807 = vpop.xlane.xlu0 %806
      %v808 = vrcp.pop %v807
      %v809 = vmul.f32 %v804, %v808
      %810 = vst.msk [vmem:[%s235] sm:$0xff] %vm798, %v809
      %812 = vset.pattern.permute.xlu0 0
      %813 = vperm.xlu0 %812, %v809
      %v814 = vpop.permute.xlu0 %813
      %v816 = vmul.f32 %v814, %v237
      %v817 = vmul.f32 %v814, %v238
      %v818 = vmul.f32 %v814, %v239
      %v819 = vmul.f32 %v814, %v240
      %820 = vset.pattern.permute.xlu0 1
      %821 = vperm.xlu0 %820, %v809
      %v822 = vpop.permute.xlu0 %821
      %v824 = vmul.f32 %v822, %v240
      %v825 = vmul.f32 %v822, %v241
      %v826 = vmul.f32 %v822, %v242
      %v827 = vmul.f32 %v822, %v243
      %832 = vrot.lane.b32.xlu0 %v824, 112
      %v833 = vpop.permute.xlu0 %832
      %834 = vrot.lane.b32.xlu0 %v825, 112
      %v835 = vpop.permute.xlu0 %834
      %836 = vrot.lane.b32.xlu0 %v826, 112
      %v837 = vpop.permute.xlu0 %836
      %838 = vrot.lane.b32.xlu0 %v827, 112
      %v839 = vpop.permute.xlu0 %838
      %vm840 = vcmask 916480
      %v841 = vsel %vm840, %v833, %v835
      %v842 = vsel %vm840, %v835, %v837
      %v843 = vsel %vm840, %v837, %v839
      %v848 = vadd.f32 %v816, %v841
      %v849 = vadd.f32 %v817, %v842
      %v850 = vadd.f32 %v818, %v843
      %v851 = vadd.f32 %v819, %v839
      %852 = vset.pattern.permute.xlu0 2
      %853 = vperm.xlu0 %852, %v809
      %v854 = vpop.permute.xlu0 %853
      %v856 = vmul.f32 %v854, %v243
      %v857 = vmul.f32 %v854, %v244
      %v858 = vmul.f32 %v854, %v245
      %v859 = vmul.f32 %v854, %v246
      %864 = vrot.lane.b32.xlu0 %v856, 96
      %v865 = vpop.permute.xlu0 %864
      %866 = vrot.lane.b32.xlu0 %v857, 96
      %v867 = vpop.permute.xlu0 %866
      %868 = vrot.lane.b32.xlu0 %v858, 96
      %v869 = vpop.permute.xlu0 %868
      %870 = vrot.lane.b32.xlu0 %v859, 96
      %v871 = vpop.permute.xlu0 %870
      %vm872 = vcmask 785408
      %v873 = vsel %vm872, %v865, %v867
      %v874 = vsel %vm872, %v867, %v869
      %v875 = vsel %vm872, %v869, %v871
      %v880 = vadd.f32 %v848, %v873
      %v881 = vadd.f32 %v849, %v874
      %v882 = vadd.f32 %v850, %v875
      %v883 = vadd.f32 %v851, %v871
      %884 = vset.pattern.permute.xlu0 3
      %885 = vperm.xlu0 %884, %v809
      %v886 = vpop.permute.xlu0 %885
      %v888 = vmul.f32 %v886, %v246
      %v889 = vmul.f32 %v886, %v247
      %v890 = vmul.f32 %v886, %v248
      %v891 = vmul.f32 %v886, %v249
      %896 = vrot.lane.b32.xlu0 %v888, 80
      %v897 = vpop.permute.xlu0 %896
      %898 = vrot.lane.b32.xlu0 %v889, 80
      %v899 = vpop.permute.xlu0 %898
      %900 = vrot.lane.b32.xlu0 %v890, 80
      %v901 = vpop.permute.xlu0 %900
      %902 = vrot.lane.b32.xlu0 %v891, 80
      %v903 = vpop.permute.xlu0 %902
      %vm904 = vcmask 654336
      %v905 = vsel %vm904, %v897, %v899
      %v906 = vsel %vm904, %v899, %v901
      %v907 = vsel %vm904, %v901, %v903
      %v912 = vadd.f32 %v880, %v905
      %v913 = vadd.f32 %v881, %v906
      %v914 = vadd.f32 %v882, %v907
      %v915 = vadd.f32 %v883, %v903
      %916 = vst [vmem:[%s231] sm:$0xff] %v912
      %917 = vst [vmem:[%s231 + $0x8] sm:$0xff] %v913
      %918 = vst [vmem:[%s231 + $0x10] sm:$0xff] %v914
      %vm919 = vcmask 130048
      %920 = vst.msk [vmem:[%s231 + $0x18] sm:$0xff] %vm919, %v915
      %p921 = scmp.lt.s32.totalorder %s17, 1
      %s922 = scalar_select %p921, %s17, 1
      %s923 = smul.addr %s922, 4
      %s924 = smul.addr %s923, 8
      %s925 = scalar_lea.vmem %s4, %s924
      %p926 = scmp.lt.s32.totalorder %s17, 1
      %s927 = scalar_select %p926, %s17, 1
      %s928 = smul.addr %s927, 8
      %s929 = scalar_lea.vmem %s5, %s928
      // Predicated region
      $region37: #{soft_attention.1} parent=35 // pred_check
        %p930 = pneg %p124
      $region38: #{soft_attention.1} parent=35 // pred_check_branch
        %932 = sbr.rel (%p930) target = $region40
      $region39: #{soft_attention.1} parent=35 // pred_region
        _
      $region40: #{soft_attention.1} parent=35 // pred_fallthru
        _
      // Predicated region
      $region41: #{soft_attention.1} parent=35 // pred_check
        %p933 = pneg %p150
      $region42: #{soft_attention.1} parent=35 // pred_check_branch
        %935 = sbr.rel (%p933) target = $region44
      $region43: #{soft_attention.1} parent=35 // pred_region
        _
      $region44: #{soft_attention.1} parent=35 // pred_fallthru
        _
    $region36: #{soft_attention.1} parent=5 // pred_fallthru
      _
    %p936 = scmp.le.s32.totalorder 2, %s12
    // Predicated region
    $region45: #{soft_attention.1} parent=5 // pred_check
      %p937 = pneg %p936
    $region46: #{soft_attention.1} parent=5 // pred_check_branch
      %939 = sbr.rel (%p937) target = $region48
    $region47: #{soft_attention.1} parent=5 // pred_region
      %s940 = ssub.s32 %s12, 2
      // Predicated region
      $region49: #{soft_attention.1} parent=47 // pred_check
        %p941 = pneg %p130
      $region50: #{soft_attention.1} parent=47 // pred_check_branch
        %943 = sbr.rel (%p941) target = $region52
      $region51: #{soft_attention.1} parent=47 // pred_region
        %p944 = scmp.lt.s32.totalorder %s18, 1
        %s945 = scalar_select %p944, %s18, 1
        %s946 = smul.addr %s945, 4
        %s947 = smul.addr %s946, 8
        %s948 = scalar_lea.vmem %s4, %s947
      $region52: #{soft_attention.1} parent=47 // pred_fallthru
        _
      // Predicated region
      $region53: #{soft_attention.1} parent=47 // pred_check
        %p949 = pneg %p156
      $region54: #{soft_attention.1} parent=47 // pred_check_branch
        %951 = sbr.rel (%p949) target = $region56
      $region55: #{soft_attention.1} parent=47 // pred_region
        %p952 = scmp.lt.s32.totalorder %s18, 1
        %s953 = scalar_select %p952, %s18, 1
        %s954 = smul.addr %s953, 8
        %s955 = scalar_lea.vmem %s5, %s954
      $region56: #{soft_attention.1} parent=47 // pred_fallthru
        _
    $region48: #{soft_attention.1} parent=5 // pred_fallthru
      _
  $region6: #{soft_attention.1} parent=0 // loop_footer
    %s16 = sadd.s32 1, %s12
  $region7: #{soft_attention.1} parent=0 // loop_footer_branch
    %11 = sbr.rel target = $region3
  $region8: #{soft_attention.1} parent=0 // loop_exit
    _

</llo_original>
